<compile_context>
chip_gen: v7x
topology: tpu7x:2x2x1
jax: 0.10.0
libtpu: 0.0.40
codegen_flags: <defaults>
</compile_context>

<pallas_src>
import functools
import math

import jax
import jax.numpy as jnp
from jax import lax
from jax.experimental import pallas as pl
from jax.experimental.pallas import tpu as pltpu


# --------------------------------------------------------------------------
# tiling helpers
# --------------------------------------------------------------------------
def _estimate_vmem(tq, tk, H, Dp, itemsize, fused_kv, has_mask):
    """Rough double-buffered VMEM footprint for one grid step (bytes)."""
    kv_w = H if fused_kv else Dp
    n = 2 * tq * H * itemsize                      # q tile (double buffered)
    n += 2 * 2 * tk * kv_w * itemsize              # k + v tiles
    if has_mask:
        n += 2 * tk * 4                            # bias tile
    if fused_kv:
        n += 2 * (3 * H * Dp * itemsize + 3 * Dp * 4)   # packed W / b
    else:
        n += 2 * (H * Dp * itemsize + Dp * 4)           # Wq / bq only
    n += 2 * tq * Dp * 4                           # output tile
    n += tq * Dp * (itemsize + 4) + 2 * tq * 4     # q_scr / acc / m / l scratch
    n += 3 * tq * tk * 4                           # s / p temporaries headroom
    return int(n)


def _pick_q_tile(Sq, B, itemsize):
    """Largest multiple-of-8 tile dividing Sq (capped at 128), else full axis."""
    cands = [t for t in (128, 64, 32, 16, 8) if Sq % t == 0]
    if itemsize <= 2:                              # bf16: avoid half-filled vregs
        wide = [t for t in cands if t >= 16]
        if wide:
            cands = wide
    if not cands:
        return Sq
    if B == 1:                                     # keep both v7x TCs busy
        multi = [t for t in cands if Sq // t >= 2]
        if multi:
            return multi[0]
    return cands[0]


def _pick_kv_tile(Sk, tq, H, Dp, itemsize, fused_kv, has_mask,
                  budget_bytes=36 * 2**20):
    """Largest 128-aligned kv tile dividing Sk that fits the VMEM budget."""
    cands = [t for t in (512, 256, 128) if Sk % t == 0]
    if not cands:
        return Sk
    for t in cands:
        if _estimate_vmem(tq, t, H, Dp, itemsize, fused_kv, has_mask) <= budget_bytes:
            return t
    return cands[-1]


# --------------------------------------------------------------------------
# kernel
# --------------------------------------------------------------------------
def _attention_head_kernel(*args, fused_kv, has_mask, compute_dtype, exp_dtype,
                           scale):
    # Unpack refs according to the statically-known variant.
    if has_mask:
        (*in_refs, bias_ref, o_ref, q_scr, m_scr, l_scr, acc_scr) = args
    else:
        (*in_refs, o_ref, q_scr, m_scr, l_scr, acc_scr) = args
        bias_ref = None
    if fused_kv:
        q_ref, k_ref, v_ref, w_ref, b_ref = in_refs       # w: (3,H,Dp), b: (3,1,Dp)
    else:
        q_ref, k_ref, v_ref, wq_ref, bq_ref = in_refs     # k/v already projected

    ki = pl.program_id(2)
    nk = pl.num_programs(2)

    # ---- per-(batch, q-tile) init: project q once, reset online-softmax state.
    @pl.when(ki == 0)
    def _init():
        if fused_kv:
            wq = w_ref[0]
            bq = b_ref[0]
        else:
            wq = wq_ref[...]
            bq = bq_ref[...]
        q = jnp.dot(q_ref[0], wq, preferred_element_type=jnp.float32) + bq
        q_scr[...] = (q * scale).astype(q_scr.dtype)      # fold 1/sqrt(D) into q
        m_scr[...] = jnp.full_like(m_scr, -jnp.inf)
        l_scr[...] = jnp.zeros_like(l_scr)
        acc_scr[...] = jnp.zeros_like(acc_scr)

    # ---- this kv tile: either project (fused path, nq == 1) or use projected.
    if fused_kv:
        k = jnp.dot(k_ref[0], w_ref[1], preferred_element_type=jnp.float32) + b_ref[1]
        v = jnp.dot(v_ref[0], w_ref[2], preferred_element_type=jnp.float32) + b_ref[2]
        k_c = k.astype(compute_dtype)
        v_c = v.astype(compute_dtype)
    else:
        k_c = k_ref[0]
        v_c = v_ref[0]

    # ---- scores: contract on D directly (no transposed copy of k).
    s = lax.dot_general(q_scr[...], k_c, (((1,), (1,)), ((), ())),
                        preferred_element_type=jnp.float32)      # (tq, tk)
    if has_mask:
        s = s + bias_ref[0]                                      # additive mask

    # ---- online softmax update (m/l/acc stay f32; exp may run in bf16).
    m_prev = m_scr[...]
    m_new = jnp.maximum(m_prev, jnp.max(s, axis=-1, keepdims=True))
    alpha = jnp.exp(m_prev - m_new)
    p = jnp.exp((s - m_new).astype(exp_dtype))                   # (tq, tk)
    l_scr[...] = alpha * l_scr[...] + jnp.sum(p, axis=-1, keepdims=True,
                                              dtype=jnp.float32)
    acc_scr[...] = alpha * acc_scr[...] + jnp.dot(
        p.astype(compute_dtype), v_c, preferred_element_type=jnp.float32)
    m_scr[...] = m_new

    # (dropout(p=0.1) with training=False is the identity -> nothing to do)

    # ---- finalize: normalize and store once per (b, q-tile).
    @pl.when(ki == nk - 1)
    def _finalize():
        l = l_scr[...]
        inv = pl.reciprocal(l, approx=True)          # EUP slot
        inv = inv * (2.0 - l * inv)                  # Newton step -> ~f32 accurate
        o_ref[0] = (acc_scr[...] * inv).astype(o_ref.dtype)


# --------------------------------------------------------------------------
# wrapper
# --------------------------------------------------------------------------
def attention_head(query, key, value, params, mask=None,
                   compute_dtype=jnp.bfloat16, exp_dtype=None,
                   pad_head_dim=True, vmem_limit_bytes=None):
    """Pallas AttentionHead forward.

    query: (B, Sq, H)   key/value: (B, Sk, H)   mask: optional (B, Sk) {0,1}.
    params: dict 'wq','bq','wk','bk','wv','bv' (weights stored (H, D)).
    compute_dtype: MXU dtype (bf16 default); accumulation/softmax stats stay f32.
    exp_dtype: dtype for the softmax exp (defaults to compute_dtype; pass
               jnp.float32 on v5e, which has no bf16 EUP path).
    returns (B, Sq, D) float32.
    """
    B, Sq, H = query.shape
    _, Sk, _ = key.shape
    D = params["wq"].shape[1]
    if exp_dtype is None:
        exp_dtype = compute_dtype
    itemsize = jnp.dtype(compute_dtype).itemsize

    # ---- lane-dense head dim: zero-pad D to a multiple of 128 (exactly the
    #      same numerics; output sliced back below).
    Dp = ((D + 127) // 128) * 128 if pad_head_dim else D

    def _pad_w(w):
        w = w.astype(jnp.float32)
        return jnp.pad(w, ((0, 0), (0, Dp - D))) if Dp != D else w

    def _pad_b(b):
        b = b.astype(jnp.float32).reshape(1, D)
        return jnp.pad(b, ((0, 0), (0, Dp - D))) if Dp != D else b

    wq, wk, wv = _pad_w(params["wq"]), _pad_w(params["wk"]), _pad_w(params["wv"])
    bq, bk, bv = _pad_b(params["bq"]), _pad_b(params["bk"]), _pad_b(params["bv"])

    # ---- pad Sk to a lane-aligned multiple of 128 (masked via -1e9 bias)
    #      instead of falling back to one giant un-tiled kv block.
    if Sk % 128 != 0 and Sk > 128:
        Sk_pad = ((Sk + 127) // 128) * 128
    else:
        Sk_pad = Sk
    pad_cols = Sk_pad - Sk
    has_mask = (mask is not None) or (pad_cols > 0)

    # ---- tiling / path selection.
    tq = _pick_q_tile(Sq, B, itemsize)
    nq = Sq // tq
    fused_kv = (nq == 1)            # pre-project K/V whenever they'd be re-read
    tk = _pick_kv_tile(Sk_pad, tq, H, Dp, itemsize, fused_kv, has_mask)
    nk = Sk_pad // tk

    # ---- build kernel inputs / specs.
    q_in = query.astype(compute_dtype)

    if fused_kv:
        k_in = key.astype(compute_dtype)
        v_in = value.astype(compute_dtype)
        if pad_cols:
            k_in = jnp.pad(k_in, ((0, 0), (0, pad_cols), (0, 0)))
            v_in = jnp.pad(v_in, ((0, 0), (0, pad_cols), (0, 0)))
        w_inputs = (jnp.stack([wq, wk, wv]).astype(compute_dtype),   # (3,H,Dp)
                    jnp.stack([bq, bk, bv]))                          # (3,1,Dp) f32
        kv_specs = [pl.BlockSpec((1, tk, H), lambda bi, qi, ki: (bi, ki, 0)),
                    pl.BlockSpec((1, tk, H), lambda bi, qi, ki: (bi, ki, 0))]
        w_specs = [pl.BlockSpec((3, H, Dp), lambda bi, qi, ki: (0, 0, 0)),
                   pl.BlockSpec((3, 1, Dp), lambda bi, qi, ki: (0, 0, 0))]
    else:
        # Pre-project K/V once (XLA) and stream (B, Sk_pad, Dp) into the flash loop.
        k_in = (jnp.einsum("bsh,hd->bsd", key.astype(compute_dtype),
                           wk.astype(compute_dtype),
                           preferred_element_type=jnp.float32)
                + bk[0]).astype(compute_dtype)
        v_in = (jnp.einsum("bsh,hd->bsd", value.astype(compute_dtype),
                           wv.astype(compute_dtype),
                           preferred_element_type=jnp.float32)
                + bv[0]).astype(compute_dtype)
        if pad_cols:
            k_in = jnp.pad(k_in, ((0, 0), (0, pad_cols), (0, 0)))
            v_in = jnp.pad(v_in, ((0, 0), (0, pad_cols), (0, 0)))
        w_inputs = (wq.astype(compute_dtype), bq)                    # (H,Dp),(1,Dp)
        kv_specs = [pl.BlockSpec((1, tk, Dp), lambda bi, qi, ki: (bi, ki, 0)),
                    pl.BlockSpec((1, tk, Dp), lambda bi, qi, ki: (bi, ki, 0))]
        w_specs = [pl.BlockSpec((H, Dp), lambda bi, qi, ki: (0, 0)),
                   pl.BlockSpec((1, Dp), lambda bi, qi, ki: (0, 0))]

    if has_mask:
        if mask is not None:
            valid = mask.astype(jnp.int32) != 0
        else:
            valid = jnp.ones((B, Sk), dtype=jnp.bool_)
        if pad_cols:
            valid = jnp.pad(valid, ((0, 0), (0, pad_cols)), constant_values=False)
        bias = jnp.where(valid[:, None, :], jnp.float32(0.0), jnp.float32(-1e9))
        bias_inputs = (bias,)
        bias_specs = [pl.BlockSpec((1, 1, tk), lambda bi, qi, ki: (bi, 0, ki))]
    else:
        bias_inputs = ()
        bias_specs = []

    kernel = functools.partial(
        _attention_head_kernel,
        fused_kv=fused_kv, has_mask=has_mask,
        compute_dtype=compute_dtype, exp_dtype=exp_dtype,
        scale=1.0 / math.sqrt(D))

    # ---- explicit VMEM budget (v5e default scoped limit is only 16 MiB;
    #      v7x has 64 MiB physical).
    est = _estimate_vmem(tq, tk, H, Dp, itemsize, fused_kv, has_mask)
    if vmem_limit_bytes is None:
        vmem_limit_bytes = int(min(max(2 * est, 16 * 2**20), 48 * 2**20))

    kv_width = H if fused_kv else Dp
    flops = 2 * B * Sq * H * Dp + 4 * B * Sq * Sk_pad * Dp
    if fused_kv:
        flops += 4 * B * nq * Sk_pad * H * Dp
    cost = pl.CostEstimate(
        flops=flops,
        transcendentals=B * Sq * Sk_pad,
        bytes_accessed=(B * Sq * H * itemsize
                        + 2 * B * nq * Sk_pad * kv_width * itemsize
                        + (B * nq * Sk_pad * 4 if has_mask else 0)
                        + ((3 * H * Dp * itemsize + 3 * Dp * 4) if fused_kv
                           else (H * Dp * itemsize + Dp * 4))
                        + B * Sq * Dp * 4))

    out = pl.pallas_call(
        kernel,
        out_shape=jax.ShapeDtypeStruct((B, Sq, Dp), jnp.float32),
        grid_spec=pltpu.PrefetchScalarGridSpec(
            num_scalar_prefetch=0,
            grid=(B, nq, nk),
            in_specs=[
                pl.BlockSpec((1, tq, H), lambda bi, qi, ki: (bi, qi, 0)),  # query
                *kv_specs,                                                 # key, value
                *w_specs,                                                  # weights, bias
                *bias_specs,                                               # mask bias
            ],
            out_specs=pl.BlockSpec((1, tq, Dp), lambda bi, qi, ki: (bi, qi, 0)),
            scratch_shapes=[
                pltpu.VMEM((tq, Dp), compute_dtype),   # q_scr (projected + scaled q)
                pltpu.VMEM((tq, 1), jnp.float32),      # m_scr
                pltpu.VMEM((tq, 1), jnp.float32),      # l_scr
                pltpu.VMEM((tq, Dp), jnp.float32),     # acc_scr
            ],
        ),
        compiler_params=pltpu.CompilerParams(
            dimension_semantics=("parallel", "parallel", "arbitrary"),
            vmem_limit_bytes=vmem_limit_bytes,
        ),
        cost_estimate=cost,
    )(q_in, k_in, v_in, *w_inputs, *bias_inputs)

    return out[..., :D] if Dp != D else out


# --------------------------------------------------------------------------
# init + reference + self-test
# --------------------------------------------------------------------------
def init_params(key, hidden_size, head_dim):
    """Deterministic nn.Linear-style init: U(-1/sqrt(H), 1/sqrt(H))."""
    bound = 1.0 / math.sqrt(hidden_size)
    ks = jax.random.split(key, 6)
    u = lambda k, shape: jax.random.uniform(
        k, shape, dtype=jnp.float32, minval=-bound, maxval=bound)
    return {
        # stored already transposed: (H, D)
        "wq": u(ks[0], (hidden_size, head_dim)),
        "bq": u(ks[1], (head_dim,)),
        "wk": u(ks[2], (hidden_size, head_dim)),
        "bk": u(ks[3], (head_dim,)),
        "wv": u(ks[4], (hidden_size, head_dim)),
        "bv": u(ks[5], (head_dim,)),
    }


def _reference(query, key, value, params, mask=None):
    """Pure-JAX reference for a sanity check."""
    D = params["wq"].shape[1]
    q = query @ params["wq"] + params["bq"]
    k = key @ params["wk"] + params["bk"]
    v = value @ params["wv"] + params["bv"]
    scores = jnp.einsum("bqd,bkd->bqk", q, k) / math.sqrt(D)
    if mask is not None:
        scores = jnp.where(mask.astype(jnp.int32)[:, None, :] == 0, -1e9, scores)
    att = jax.nn.softmax(scores, axis=-1)
    return jnp.einsum("bqk,bkd->bqd", att, v)


if __name__ == "__main__":
    B, S, H, D = 2, 8, 32, 16

    root = jax.random.PRNGKey(0)
    k_q, k_k, k_v, k_m, k_p = jax.random.split(root, 5)

    query = jax.random.normal(k_q, (B, S, H), dtype=jnp.float32)
    key = jax.random.normal(k_k, (B, S, H), dtype=jnp.float32)
    value = jax.random.normal(k_v, (B, S, H), dtype=jnp.float32)
    mask = (jax.random.uniform(k_m, (B, S)) > 0.2).astype(jnp.int32)

    params = init_params(k_p, H, D)
    ref = _reference(query, key, value, params, mask=mask)

    # 1) default path: bf16 MXU + bf16 exp, f32 accumulation, masked (fused kv).
    out = jax.block_until_ready(attention_head(query, key, value, params, mask=mask))
    assert out.shape == (B, S, D)
    assert jnp.allclose(out, ref, atol=5e-2, rtol=5e-2), "bf16 masked mismatch"

    # 2) f32 path, masked -- tight tolerance.
    out_f32 = jax.block_until_ready(
        attention_head(query, key, value, params, mask=mask,
                       compute_dtype=jnp.float32))
    assert jnp.allclose(out_f32, ref, atol=1e-4, rtol=1e-4), "f32 masked mismatch"

    # 3) f32 path, no mask -> exercises the bias-free specialized kernel.
    out_nm = jax.block_until_ready(
        attention_head(query, key, value, params, compute_dtype=jnp.float32))
    ref_nm = _reference(query, key, value, params)
    assert jnp.allclose(out_nm, ref_nm, atol=1e-4, rtol=1e-4), "f32 unmasked mismatch"

    # 4) longer sequences -> exercises K/V pre-projection (nq > 1) and Sk padding.
    Sq2, Sk2 = 256, 320
    k_q2, k_k2, k_v2, k_m2 = jax.random.split(jax.random.PRNGKey(1), 4)
    query2 = jax.random.normal(k_q2, (B, Sq2, H), dtype=jnp.float32)
    key2 = jax.random.normal(k_k2, (B, Sk2, H), dtype=jnp.float32)
    value2 = jax.random.normal(k_v2, (B, Sk2, H), dtype=jnp.float32)
    mask2 = (jax.random.uniform(k_m2, (B, Sk2)) > 0.2).astype(jnp.int32)
    out2 = jax.block_until_ready(
        attention_head(query2, key2, value2, params, mask=mask2,
                       compute_dtype=jnp.float32))
    ref2 = _reference(query2, key2, value2, params, mask=mask2)
    assert out2.shape == (B, Sq2, D)
    assert jnp.allclose(out2, ref2, atol=1e-4, rtol=1e-4), "pre-projected kv mismatch"

    print("KERNEL_OK")
</pallas_src>

<mosaic_0001>
module attributes {stable_mosaic.version = 11 : i64} {
  func.func @_attention_head_kernel(%arg0: i32, %arg1: i32, %arg2: i32, %arg3: memref<1x8x32xbf16, #tpu.memory_space<vmem>>, %arg4: memref<1x8x32xbf16, #tpu.memory_space<vmem>>, %arg5: memref<1x8x32xbf16, #tpu.memory_space<vmem>>, %arg6: memref<3x32x128xbf16, #tpu.memory_space<vmem>>, %arg7: memref<3x1x128xf32, #tpu.memory_space<vmem>>, %arg8: memref<1x1x8xf32, #tpu.memory_space<vmem>>, %arg9: memref<1x8x128xf32, #tpu.memory_space<vmem>>, %arg10: memref<8x128xbf16, #tpu.memory_space<vmem>>, %arg11: memref<8x1xf32, #tpu.memory_space<vmem>>, %arg12: memref<8x1xf32, #tpu.memory_space<vmem>>, %arg13: memref<8x128xf32, #tpu.memory_space<vmem>>) attributes {dimension_semantics = [#tpu.dimension_semantics<parallel>, #tpu.dimension_semantics<parallel>, #tpu.dimension_semantics<arbitrary>], iteration_bounds = array<i64: 2, 1, 1>, scalar_prefetch = 0 : i64, scratch_operands = 4 : i64, tpu.core_type = #tpu.core_type<tc>, window_params = [{transform_indices = @transform_0, window_bounds = array<i64: 1, 8, 32>}, {transform_indices = @transform_1, window_bounds = array<i64: 1, 8, 32>}, {transform_indices = @transform_2, window_bounds = array<i64: 1, 8, 32>}, {pipeline_mode = #tpu.pipeline_mode<synchronous>, transform_indices = @transform_3, window_bounds = array<i64: 3, 32, 128>}, {pipeline_mode = #tpu.pipeline_mode<synchronous>, transform_indices = @transform_4, window_bounds = array<i64: 3, 1, 128>}, {transform_indices = @transform_5, window_bounds = array<i64: 1, 1, 8>}, {transform_indices = @transform_6, window_bounds = array<i64: 1, 8, 128>}]} {
    %c0_i32 = arith.constant 0 : i32
    %0 = arith.cmpi eq, %arg2, %c0_i32 : i32
    %1 = arith.extui %0 : i1 to i32
    %c0_i32_0 = arith.constant 0 : i32
    %2 = arith.cmpi ne, %1, %c0_i32_0 : i32
    scf.if %2 {
      %c0_40 = arith.constant 0 : index
      %c0_41 = arith.constant 0 : index
      %c0_42 = arith.constant 0 : index
      %56 = vector.load %arg6[%c0_40, %c0_41, %c0_42] : memref<3x32x128xbf16, #tpu.memory_space<vmem>>, vector<1x32x128xbf16>
      %57 = vector.shape_cast %56 : vector<1x32x128xbf16> to vector<32x128xbf16>
      %c0_43 = arith.constant 0 : index
      %c0_44 = arith.constant 0 : index
      %c0_45 = arith.constant 0 : index
      %58 = vector.load %arg7[%c0_43, %c0_44, %c0_45] : memref<3x1x128xf32, #tpu.memory_space<vmem>>, vector<1x1x128xf32>
      %59 = vector.shape_cast %58 : vector<1x1x128xf32> to vector<1x128xf32>
      %c0_46 = arith.constant 0 : index
      %c0_47 = arith.constant 0 : index
      %c0_48 = arith.constant 0 : index
      %60 = vector.load %arg3[%c0_46, %c0_47, %c0_48] : memref<1x8x32xbf16, #tpu.memory_space<vmem>>, vector<1x8x32xbf16>
      %61 = vector.shape_cast %60 : vector<1x8x32xbf16> to vector<8x32xbf16>
      %cst_49 = arith.constant dense<0.000000e+00> : vector<8x128xf32>
      %62 = tpu.matmul %61, %57, %cst_49 {dimension_numbers = #tpu.dot_dimension_numbers<[1], [0], [0], [1], [0, 0, 1, 1], [], []>} : vector<8x32xbf16>, vector<32x128xbf16>, vector<8x128xf32> -> vector<8x128xf32>
      %63 = vector.broadcast %59 : vector<1x128xf32> to vector<8x128xf32>
      %64 = arith.addf %62, %63 : vector<8x128xf32>
      %cst_50 = arith.constant 2.500000e-01 : f32
      %65 = vector.broadcast %cst_50 : f32 to vector<8x128xf32>
      %66 = arith.mulf %64, %65 : vector<8x128xf32>
      %67 = arith.truncf %66 : vector<8x128xf32> to vector<8x128xbf16>
      %c0_51 = arith.constant 0 : index
      %c0_52 = arith.constant 0 : index
      %68 = vector.load %arg10[%c0_51, %c0_52] : memref<8x128xbf16, #tpu.memory_space<vmem>>, vector<8x128xbf16>
      tpu.vector_store %arg10[%c0_51, %c0_52], %67 {strides = array<i32>} : memref<8x128xbf16, #tpu.memory_space<vmem>>, vector<8x128xbf16>,
      %cst_53 = arith.constant 0xFF800000 : f32
      %69 = vector.broadcast %cst_53 : f32 to vector<8x1xf32>
      %c0_54 = arith.constant 0 : index
      %c0_55 = arith.constant 0 : index
      %70 = vector.load %arg11[%c0_54, %c0_55] : memref<8x1xf32, #tpu.memory_space<vmem>>, vector<8x1xf32>
      tpu.vector_store %arg11[%c0_54, %c0_55], %69 {strides = array<i32>} : memref<8x1xf32, #tpu.memory_space<vmem>>, vector<8x1xf32>,
      %cst_56 = arith.constant 0.000000e+00 : f32
      %71 = vector.broadcast %cst_56 : f32 to vector<8x1xf32>
      %c0_57 = arith.constant 0 : index
      %c0_58 = arith.constant 0 : index
      %72 = vector.load %arg12[%c0_57, %c0_58] : memref<8x1xf32, #tpu.memory_space<vmem>>, vector<8x1xf32>
      tpu.vector_store %arg12[%c0_57, %c0_58], %71 {strides = array<i32>} : memref<8x1xf32, #tpu.memory_space<vmem>>, vector<8x1xf32>,
      %cst_59 = arith.constant 0.000000e+00 : f32
      %73 = vector.broadcast %cst_59 : f32 to vector<8x128xf32>
      %c0_60 = arith.constant 0 : index
      %c0_61 = arith.constant 0 : index
      %74 = vector.load %arg13[%c0_60, %c0_61] : memref<8x128xf32, #tpu.memory_space<vmem>>, vector<8x128xf32>
      tpu.vector_store %arg13[%c0_60, %c0_61], %73 {strides = array<i32>} : memref<8x128xf32, #tpu.memory_space<vmem>>, vector<8x128xf32>,
    } else {
    }
    %c0 = arith.constant 0 : index
    %c0_1 = arith.constant 0 : index
    %c0_2 = arith.constant 0 : index
    %3 = vector.load %arg4[%c0, %c0_1, %c0_2] : memref<1x8x32xbf16, #tpu.memory_space<vmem>>, vector<1x8x32xbf16>
    %4 = vector.shape_cast %3 : vector<1x8x32xbf16> to vector<8x32xbf16>
    %c1 = arith.constant 1 : index
    %c0_3 = arith.constant 0 : index
    %c0_4 = arith.constant 0 : index
    %5 = vector.load %arg6[%c1, %c0_3, %c0_4] : memref<3x32x128xbf16, #tpu.memory_space<vmem>>, vector<1x32x128xbf16>
    %6 = vector.shape_cast %5 : vector<1x32x128xbf16> to vector<32x128xbf16>
    %cst = arith.constant dense<0.000000e+00> : vector<8x128xf32>
    %7 = tpu.matmul %4, %6, %cst {dimension_numbers = #tpu.dot_dimension_numbers<[1], [0], [0], [1], [0, 0, 1, 1], [], []>} : vector<8x32xbf16>, vector<32x128xbf16>, vector<8x128xf32> -> vector<8x128xf32>
    %c1_5 = arith.constant 1 : index
    %c0_6 = arith.constant 0 : index
    %c0_7 = arith.constant 0 : index
    %8 = vector.load %arg7[%c1_5, %c0_6, %c0_7] : memref<3x1x128xf32, #tpu.memory_space<vmem>>, vector<1x1x128xf32>
    %9 = vector.shape_cast %8 : vector<1x1x128xf32> to vector<1x128xf32>
    %10 = vector.broadcast %9 : vector<1x128xf32> to vector<8x128xf32>
    %11 = arith.addf %7, %10 : vector<8x128xf32>
    %c0_8 = arith.constant 0 : index
    %c0_9 = arith.constant 0 : index
    %c0_10 = arith.constant 0 : index
    %12 = vector.load %arg5[%c0_8, %c0_9, %c0_10] : memref<1x8x32xbf16, #tpu.memory_space<vmem>>, vector<1x8x32xbf16>
    %13 = vector.shape_cast %12 : vector<1x8x32xbf16> to vector<8x32xbf16>
    %c2 = arith.constant 2 : index
    %c0_11 = arith.constant 0 : index
    %c0_12 = arith.constant 0 : index
    %14 = vector.load %arg6[%c2, %c0_11, %c0_12] : memref<3x32x128xbf16, #tpu.memory_space<vmem>>, vector<1x32x128xbf16>
    %15 = vector.shape_cast %14 : vector<1x32x128xbf16> to vector<32x128xbf16>
    %cst_13 = arith.constant dense<0.000000e+00> : vector<8x128xf32>
    %16 = tpu.matmul %13, %15, %cst_13 {dimension_numbers = #tpu.dot_dimension_numbers<[1], [0], [0], [1], [0, 0, 1, 1], [], []>} : vector<8x32xbf16>, vector<32x128xbf16>, vector<8x128xf32> -> vector<8x128xf32>
    %c2_14 = arith.constant 2 : index
    %c0_15 = arith.constant 0 : index
    %c0_16 = arith.constant 0 : index
    %17 = vector.load %arg7[%c2_14, %c0_15, %c0_16] : memref<3x1x128xf32, #tpu.memory_space<vmem>>, vector<1x1x128xf32>
    %18 = vector.shape_cast %17 : vector<1x1x128xf32> to vector<1x128xf32>
    %19 = vector.broadcast %18 : vector<1x128xf32> to vector<8x128xf32>
    %20 = arith.addf %16, %19 : vector<8x128xf32>
    %21 = arith.truncf %11 : vector<8x128xf32> to vector<8x128xbf16>
    %22 = arith.truncf %20 : vector<8x128xf32> to vector<8x128xbf16>
    %c0_17 = arith.constant 0 : index
    %c0_18 = arith.constant 0 : index
    %23 = vector.load %arg10[%c0_17, %c0_18] : memref<8x128xbf16, #tpu.memory_space<vmem>>, vector<8x128xbf16>
    %cst_19 = arith.constant dense<0.000000e+00> : vector<8x8xf32>
    %24 = tpu.matmul %23, %21, %cst_19 {dimension_numbers = #tpu.dot_dimension_numbers<[1], [1], [0], [0], [0, 0, 1, 0], [], []>} : vector<8x128xbf16>, vector<8x128xbf16>, vector<8x8xf32> -> vector<8x8xf32>
    %c0_20 = arith.constant 0 : index
    %c0_21 = arith.constant 0 : index
    %c0_22 = arith.constant 0 : index
    %25 = vector.load %arg8[%c0_20, %c0_21, %c0_22] : memref<1x1x8xf32, #tpu.memory_space<vmem>>, vector<1x1x8xf32>
    %26 = vector.shape_cast %25 : vector<1x1x8xf32> to vector<1x8xf32>
    %27 = vector.broadcast %26 : vector<1x8xf32> to vector<8x8xf32>
    %28 = arith.addf %24, %27 : vector<8x8xf32>
    %c0_23 = arith.constant 0 : index
    %c0_24 = arith.constant 0 : index
    %29 = vector.load %arg11[%c0_23, %c0_24] : memref<8x1xf32, #tpu.memory_space<vmem>>, vector<8x1xf32>
    %cst_25 = arith.constant dense<0xFF800000> : vector<8xf32>
    %30 = vector.multi_reduction <maximumf>, %28, %cst_25 [1] : vector<8x8xf32> to vector<8xf32>
    %31 = vector.shape_cast %30 : vector<8xf32> to vector<8x1xf32>
    %32 = arith.maximumf %29, %31 : vector<8x1xf32>
    %33 = arith.subf %29, %32 : vector<8x1xf32>
    %34 = math.exp %33 : vector<8x1xf32>
    %35 = vector.broadcast %32 : vector<8x1xf32> to vector<8x8xf32>
    %36 = arith.subf %28, %35 : vector<8x8xf32>
    %37 = arith.truncf %36 : vector<8x8xf32> to vector<8x8xbf16>
    %38 = math.exp %37 : vector<8x8xbf16>
    %c0_26 = arith.constant 0 : index
    %c0_27 = arith.constant 0 : index
    %39 = vector.load %arg12[%c0_26, %c0_27] : memref<8x1xf32, #tpu.memory_space<vmem>>, vector<8x1xf32>
    %40 = arith.mulf %34, %39 : vector<8x1xf32>
    %41 = arith.extf %38 : vector<8x8xbf16> to vector<8x8xf32>
    %cst_28 = arith.constant dense<0.000000e+00> : vector<8xf32>
    %42 = vector.multi_reduction <add>, %41, %cst_28 [1] : vector<8x8xf32> to vector<8xf32>
    %43 = vector.shape_cast %42 : vector<8xf32> to vector<8x1xf32>
    %44 = arith.addf %40, %43 : vector<8x1xf32>
    %c0_29 = arith.constant 0 : index
    %c0_30 = arith.constant 0 : index
    %45 = vector.load %arg12[%c0_29, %c0_30] : memref<8x1xf32, #tpu.memory_space<vmem>>, vector<8x1xf32>
    tpu.vector_store %arg12[%c0_29, %c0_30], %44 {strides = array<i32>} : memref<8x1xf32, #tpu.memory_space<vmem>>, vector<8x1xf32>,
    %c0_31 = arith.constant 0 : index
    %c0_32 = arith.constant 0 : index
    %46 = vector.load %arg13[%c0_31, %c0_32] : memref<8x128xf32, #tpu.memory_space<vmem>>, vector<8x128xf32>
    %47 = vector.broadcast %34 : vector<8x1xf32> to vector<8x128xf32>
    %48 = arith.mulf %47, %46 : vector<8x128xf32>
    %cst_33 = arith.constant dense<0.000000e+00> : vector<8x128xf32>
    %49 = tpu.matmul %38, %22, %cst_33 {dimension_numbers = #tpu.dot_dimension_numbers<[1], [0], [0], [1], [0, 0, 1, 1], [], []>} : vector<8x8xbf16>, vector<8x128xbf16>, vector<8x128xf32> -> vector<8x128xf32>
    %50 = arith.addf %48, %49 : vector<8x128xf32>
    %c0_34 = arith.constant 0 : index
    %c0_35 = arith.constant 0 : index
    %51 = vector.load %arg13[%c0_34, %c0_35] : memref<8x128xf32, #tpu.memory_space<vmem>>, vector<8x128xf32>
    tpu.vector_store %arg13[%c0_34, %c0_35], %50 {strides = array<i32>} : memref<8x128xf32, #tpu.memory_space<vmem>>, vector<8x128xf32>,
    %c0_36 = arith.constant 0 : index
    %c0_37 = arith.constant 0 : index
    %52 = vector.load %arg11[%c0_36, %c0_37] : memref<8x1xf32, #tpu.memory_space<vmem>>, vector<8x1xf32>
    tpu.vector_store %arg11[%c0_36, %c0_37], %32 {strides = array<i32>} : memref<8x1xf32, #tpu.memory_space<vmem>>, vector<8x1xf32>,
    %c0_i32_38 = arith.constant 0 : i32
    %53 = arith.cmpi eq, %arg2, %c0_i32_38 : i32
    %54 = arith.extui %53 : i1 to i32
    %c0_i32_39 = arith.constant 0 : i32
    %55 = arith.cmpi ne, %54, %c0_i32_39 : i32
    scf.if %55 {
      %c0_40 = arith.constant 0 : index
      %c0_41 = arith.constant 0 : index
      %56 = vector.load %arg12[%c0_40, %c0_41] : memref<8x1xf32, #tpu.memory_space<vmem>>, vector<8x1xf32>
      %57 = tpu.reciprocal %56 {approx = true} : vector<8x1xf32> -> vector<8x1xf32>
      %58 = arith.mulf %56, %57 : vector<8x1xf32>
      %cst_42 = arith.constant 2.000000e+00 : f32
      %59 = vector.broadcast %cst_42 : f32 to vector<8x1xf32>
      %60 = arith.subf %59, %58 : vector<8x1xf32>
      %61 = arith.mulf %57, %60 : vector<8x1xf32>
      %c0_43 = arith.constant 0 : index
      %c0_44 = arith.constant 0 : index
      %62 = vector.load %arg13[%c0_43, %c0_44] : memref<8x128xf32, #tpu.memory_space<vmem>>, vector<8x128xf32>
      %63 = vector.broadcast %61 : vector<8x1xf32> to vector<8x128xf32>
      %64 = arith.mulf %62, %63 : vector<8x128xf32>
      %c0_45 = arith.constant 0 : index
      %c0_46 = arith.constant 0 : index
      %c0_47 = arith.constant 0 : index
      %65 = vector.load %arg9[%c0_45, %c0_46, %c0_47] : memref<1x8x128xf32, #tpu.memory_space<vmem>>, vector<1x8x128xf32>
      %66 = vector.shape_cast %65 : vector<1x8x128xf32> to vector<8x128xf32>
      %67 = vector.shape_cast %64 : vector<8x128xf32> to vector<1x8x128xf32>
      tpu.vector_store %arg9[%c0_45, %c0_46, %c0_47], %67 {strides = array<i32>} : memref<1x8x128xf32, #tpu.memory_space<vmem>>, vector<1x8x128xf32>,
    } else {
    }
    return
  }
  func.func @transform_0(%arg0: i32, %arg1: i32, %arg2: i32) -> (i32, i32, i32) {
    %c0_i32 = arith.constant 0 : i32
    %c0_i32_0 = arith.constant 0 : i32
    return %arg0, %arg1, %c0_i32 : i32, i32, i32
  }
  func.func @transform_1(%arg0: i32, %arg1: i32, %arg2: i32) -> (i32, i32, i32) {
    %c0_i32 = arith.constant 0 : i32
    %c0_i32_0 = arith.constant 0 : i32
    return %arg0, %arg2, %c0_i32 : i32, i32, i32
  }
  func.func @transform_2(%arg0: i32, %arg1: i32, %arg2: i32) -> (i32, i32, i32) {
    %c0_i32 = arith.constant 0 : i32
    %c0_i32_0 = arith.constant 0 : i32
    return %arg0, %arg2, %c0_i32 : i32, i32, i32
  }
  func.func @transform_3(%arg0: i32, %arg1: i32, %arg2: i32) -> (i32, i32, i32) {
    %c0_i32 = arith.constant 0 : i32
    %c0_i32_0 = arith.constant 0 : i32
    %c0_i32_1 = arith.constant 0 : i32
    %c0_i32_2 = arith.constant 0 : i32
    return %c0_i32, %c0_i32_0, %c0_i32_1 : i32, i32, i32
  }
  func.func @transform_4(%arg0: i32, %arg1: i32, %arg2: i32) -> (i32, i32, i32) {
    %c0_i32 = arith.constant 0 : i32
    %c0_i32_0 = arith.constant 0 : i32
    %c0_i32_1 = arith.constant 0 : i32
    %c0_i32_2 = arith.constant 0 : i32
    return %c0_i32, %c0_i32_0, %c0_i32_1 : i32, i32, i32
  }
  func.func @transform_5(%arg0: i32, %arg1: i32, %arg2: i32) -> (i32, i32, i32) {
    %c0_i32 = arith.constant 0 : i32
    %c0_i32_0 = arith.constant 0 : i32
    return %arg0, %c0_i32, %arg2 : i32, i32, i32
  }
  func.func @transform_6(%arg0: i32, %arg1: i32, %arg2: i32) -> (i32, i32, i32) {
    %c0_i32 = arith.constant 0 : i32
    %c0_i32_0 = arith.constant 0 : i32
    return %arg0, %arg1, %c0_i32 : i32, i32, i32
  }
}

</mosaic_0001>

<llo_original>
// kernel: tpu_custom_call.1
$region0: #{tpu_custom_call.1}
  #allocation0 [shape = 'u32[]', space=smem, size = 0x4, offset = 0x4, fixed_abs, tag = 'smem constant byte address 0x4 - core index']
  #allocation1 [shape = 'u32[144,128]{1,0:T(1,128)}', space=vmem, size = 0x12000, scoped, tag = 'internal scratch']
  #allocation2 [shape = 'bf16[8,128]{1,0:T(8,128)(2,1)}', space=vmem, size = 0x800, scoped, tag = 'scratch operand']
  #allocation3 [shape = 'f32[8,1]{1,0:T(8,128)}', space=vmem, size = 0x1000, scoped, tag = 'scratch operand']
  #allocation4 [shape = 'f32[8,1]{1,0:T(8,128)}', space=vmem, size = 0x1000, scoped, tag = 'scratch operand']
  #allocation5 [shape = 'f32[8,128]{1,0:T(8,128)}', space=vmem, size = 0x1000, scoped, tag = 'scratch operand']
  %s0 = inlined_call_operand.hbm [shape: bf16[2,8,32], index: 0, kind: input, shape index: {}]
  %s1 = inlined_call_operand.hbm [shape: bf16[2,8,32], index: 1, kind: input, shape index: {}]
  %s2 = inlined_call_operand.hbm [shape: bf16[2,8,32], index: 2, kind: input, shape index: {}]
  %s3 = inlined_call_operand.hbm [shape: bf16[3,32,128], index: 3, kind: input, shape index: {}]
  %s4 = inlined_call_operand.vmem [shape: f32[3,1,128], index: 4, kind: input, shape index: {}]
  %s5 = inlined_call_operand.vmem [shape: f32[2,1,8], index: 5, kind: input, shape index: {}]
  %s6 = inlined_call_operand.hbm [shape: f32[2,8,128], index: 6, kind: output, shape index: {}]
  %s7 = sld [smem:[#allocation0]]
  $region81: #{tpu_custom_call.1} parent=0
    _
  %s9 = ssub.s32 1, %s7
  %s10 = scalar_select 0, %s9, %s7
  $region1: #{tpu_custom_call.1} parent=0
    #allocation6 [shape = 'u8[4096]{0}', space=vmem, size = 0x1000, scoped, tag = 'input window, operand 0']
    #allocation7 [shape = 's32[2]{0}', space=sflag, size = 0x8, scoped, tag = 'scoped memory for tpu_custom_call.1']
    #allocation8 [shape = 's32[2]{0}', space=sflag, size = 0x8, scoped, tag = 'scoped memory for tpu_custom_call.1']
    #allocation9 [shape = 'u8[4096]{0}', space=vmem, size = 0x1000, scoped, tag = 'input window, operand 1']
    #allocation10 [shape = 's32[2]{0}', space=sflag, size = 0x8, scoped, tag = 'scoped memory for tpu_custom_call.1']
    #allocation11 [shape = 'u8[4096]{0}', space=vmem, size = 0x1000, scoped, tag = 'input window, operand 2']
    #allocation12 [shape = 'u8[24576]{0}', space=vmem, size = 0x6000, scoped, tag = 'input window, operand 3, single buffered']
    #allocation13 [shape = 's32[1]{0}', space=sflag, size = 0x4, scoped, tag = 'scoped memory for tpu_custom_call.1']
    #allocation14 [shape = 'u8[8192]{0}', space=vmem, size = 0x2000, scoped, tag = 'output window, operand 0']
    %11 = vsyncpa [#allocation7], 0
    %s12 = scalar_lea.sflag [#allocation7], 1
    %13 = vsyncpa %s12, 0
    %14 = vsyncpa [#allocation10], 0
    %s15 = scalar_lea.sflag [#allocation10], 1
    %16 = vsyncpa %s15, 0
    %17 = vsyncpa [#allocation13], 0
    %18 = vsyncpa [#allocation8], 0
    %s19 = scalar_lea.sflag [#allocation8], 1
    %20 = vsyncpa %s19, 0
    loop: start=0, step=1, limit=4
    $region2: #{tpu_custom_call.1} parent=1 // loop_pre_header
      _
    $region3: #{tpu_custom_call.1} parent=1 // loop_header
      %s22 = sphi 0, %s26
      %p23 = scmp.ge.s32.totalorder %s22, 4
      %s29 = sphi 0, %s48
      %s30 = sphi 0, %s44
      %s31 = sphi 0, %s40
      %s32 = sphi 0, %s29
      %s33 = sphi 0, %s30
      %s34 = sphi 0, %s31
      %s35 = sphi 0, %s32
      %s36 = sphi 0, %s33
      %s37 = sphi 0, %s34
      %s53 = sphi 0, %s55
      %s56 = sphi 0, %s53
      %s57 = sphi 0, %s56
      %s73 = sphi 0, %s57
      %s81 = sphi 0, %s83
      %s84 = sphi 0, %s81
      %s85 = sphi 0, %s84
      %s101 = sphi 0, %s85
      %s109 = sphi 0, %s111
      %s112 = sphi 0, %s109
      %s113 = sphi 0, %s112
      %s129 = sphi 0, %s113
      %s133 = sphi 0, %s133
      %s135 = sphi 0, %s133
      %s136 = sphi 0, %s135
      %s150 = sphi 0, %s136
      %s154 = sphi 0, %s154
      %s156 = sphi 0, %s154
      %s157 = sphi 0, %s156
      %s171 = sphi 0, %s157
      %s179 = sphi 0, %s181
      %s182 = sphi 0, %s179
      %s183 = sphi 0, %s182
      %s199 = sphi 0, %s183
      %s207 = sphi 0, %s209
      %s210 = sphi 0, %s207
      %s211 = sphi 0, %s210
      %s227 = sphi 0, %s211
    $region4: #{tpu_custom_call.1} parent=1 // loop_header_branch
      %25 = sbr.rel (%p23) target = $region8
    $region5: #{tpu_custom_call.1} parent=1 // loop_body
      %s27 = ssub.s32 %s22, 1
      %s28 = ssub.s32 %s22, 2
      %s38 = sadd.s32 1, %s31
      %p39 = scmp.ge.s32.totalorder %s38, 1
      %s40 = scalar_select %p39, 0, %s38
      %s41 = sadd.s32 1, %s30
      %s42 = scalar_select %p39, %s41, %s30
      %p43 = scmp.ge.s32.totalorder %s42, 1
      %s44 = scalar_select %p43, 0, %s42
      %s45 = sadd.s32 1, %s29
      %s46 = scalar_select %p43, %s45, %s29
      %p47 = scmp.ge.s32.totalorder %s46, 2
      %s48 = scalar_select %p47, 0, %s46
      %s49 = ssub.s32 %s29, %s48
      %s50 = ssub.s32 %s30, %s44
      %s51 = sor.u32 %s49, %s50
      %p52 = scmp.eq.s32.totalorder %s51, 0
      %s54 = sadd.s32 %s53, 1
      %s55 = scalar_select %p52, %s53, %s54
      %p58 = pneg %p52
      %p59 = scmp.eq.s32.totalorder %s22, 1
      %p60 = por %p58, %p59
      %p61 = scmp.ne.s32.totalorder %s53, %s56
      %p62 = scmp.eq.s32.totalorder %s22, 0
      %p63 = por %p61, %p62
      %p64 = scmp.ne.s32.totalorder %s53, %s56
      %p65 = scmp.eq.s32.totalorder %s27, 1
      %p66 = por %p64, %p65
      %p67 = scmp.ne.s32.totalorder %s56, %s57
      %p68 = scmp.eq.s32.totalorder %s27, 0
      %p69 = por %p67, %p68
      %p70 = scmp.ne.s32.totalorder %s56, %s57
      %p71 = scmp.eq.s32.totalorder %s28, 1
      %p72 = por %p70, %p71
      %p74 = scmp.ne.s32.totalorder %s57, %s73
      %p75 = scmp.eq.s32.totalorder %s28, 0
      %p76 = por %p74, %p75
      %s77 = ssub.s32 %s29, %s48
      %s78 = ssub.s32 %s31, %s40
      %s79 = sor.u32 %s77, %s78
      %p80 = scmp.eq.s32.totalorder %s79, 0
      %s82 = sadd.s32 %s81, 1
      %s83 = scalar_select %p80, %s81, %s82
      %p86 = pneg %p80
      %p87 = scmp.eq.s32.totalorder %s22, 1
      %p88 = por %p86, %p87
      %p89 = scmp.ne.s32.totalorder %s81, %s84
      %p90 = scmp.eq.s32.totalorder %s22, 0
      %p91 = por %p89, %p90
      %p92 = scmp.ne.s32.totalorder %s81, %s84
      %p93 = scmp.eq.s32.totalorder %s27, 1
      %p94 = por %p92, %p93
      %p95 = scmp.ne.s32.totalorder %s84, %s85
      %p96 = scmp.eq.s32.totalorder %s27, 0
      %p97 = por %p95, %p96
      %p98 = scmp.ne.s32.totalorder %s84, %s85
      %p99 = scmp.eq.s32.totalorder %s28, 1
      %p100 = por %p98, %p99
      %p102 = scmp.ne.s32.totalorder %s85, %s101
      %p103 = scmp.eq.s32.totalorder %s28, 0
      %p104 = por %p102, %p103
      %s105 = ssub.s32 %s29, %s48
      %s106 = ssub.s32 %s31, %s40
      %s107 = sor.u32 %s105, %s106
      %p108 = scmp.eq.s32.totalorder %s107, 0
      %s110 = sadd.s32 %s109, 1
      %s111 = scalar_select %p108, %s109, %s110
      %p114 = pneg %p108
      %p115 = scmp.eq.s32.totalorder %s22, 1
      %p116 = por %p114, %p115
      %p117 = scmp.ne.s32.totalorder %s109, %s112
      %p118 = scmp.eq.s32.totalorder %s22, 0
      %p119 = por %p117, %p118
      %p120 = scmp.ne.s32.totalorder %s109, %s112
      %p121 = scmp.eq.s32.totalorder %s27, 1
      %p122 = por %p120, %p121
      %p123 = scmp.ne.s32.totalorder %s112, %s113
      %p124 = scmp.eq.s32.totalorder %s27, 0
      %p125 = por %p123, %p124
      %p126 = scmp.ne.s32.totalorder %s112, %s113
      %p127 = scmp.eq.s32.totalorder %s28, 1
      %p128 = por %p126, %p127
      %p130 = scmp.ne.s32.totalorder %s113, %s129
      %p131 = scmp.eq.s32.totalorder %s28, 0
      %p132 = por %p130, %p131
      %s134 = sadd.s32 %s133, 1
      %p137 = scmp.eq.s32.totalorder %s22, 1
      %p138 = scmp.ne.s32.totalorder %s133, %s135
      %p139 = scmp.eq.s32.totalorder %s22, 0
      %p140 = por %p138, %p139
      %p141 = scmp.ne.s32.totalorder %s133, %s135
      %p142 = scmp.eq.s32.totalorder %s27, 1
      %p143 = por %p141, %p142
      %p144 = scmp.ne.s32.totalorder %s135, %s136
      %p145 = scmp.eq.s32.totalorder %s27, 0
      %p146 = por %p144, %p145
      %p147 = scmp.ne.s32.totalorder %s135, %s136
      %p148 = scmp.eq.s32.totalorder %s28, 1
      %p149 = por %p147, %p148
      %p151 = scmp.ne.s32.totalorder %s136, %s150
      %p152 = scmp.eq.s32.totalorder %s28, 0
      %p153 = por %p151, %p152
      %s155 = sadd.s32 %s154, 1
      %p158 = scmp.eq.s32.totalorder %s22, 1
      %p159 = scmp.ne.s32.totalorder %s154, %s156
      %p160 = scmp.eq.s32.totalorder %s22, 0
      %p161 = por %p159, %p160
      %p162 = scmp.ne.s32.totalorder %s154, %s156
      %p163 = scmp.eq.s32.totalorder %s27, 1
      %p164 = por %p162, %p163
      %p165 = scmp.ne.s32.totalorder %s156, %s157
      %p166 = scmp.eq.s32.totalorder %s27, 0
      %p167 = por %p165, %p166
      %p168 = scmp.ne.s32.totalorder %s156, %s157
      %p169 = scmp.eq.s32.totalorder %s28, 1
      %p170 = por %p168, %p169
      %p172 = scmp.ne.s32.totalorder %s157, %s171
      %p173 = scmp.eq.s32.totalorder %s28, 0
      %p174 = por %p172, %p173
      %s175 = ssub.s32 %s29, %s48
      %s176 = ssub.s32 %s31, %s40
      %s177 = sor.u32 %s175, %s176
      %p178 = scmp.eq.s32.totalorder %s177, 0
      %s180 = sadd.s32 %s179, 1
      %s181 = scalar_select %p178, %s179, %s180
      %p184 = pneg %p178
      %p185 = scmp.eq.s32.totalorder %s22, 1
      %p186 = por %p184, %p185
      %p187 = scmp.ne.s32.totalorder %s179, %s182
      %p188 = scmp.eq.s32.totalorder %s22, 0
      %p189 = por %p187, %p188
      %p190 = scmp.ne.s32.totalorder %s179, %s182
      %p191 = scmp.eq.s32.totalorder %s27, 1
      %p192 = por %p190, %p191
      %p193 = scmp.ne.s32.totalorder %s182, %s183
      %p194 = scmp.eq.s32.totalorder %s27, 0
      %p195 = por %p193, %p194
      %p196 = scmp.ne.s32.totalorder %s182, %s183
      %p197 = scmp.eq.s32.totalorder %s28, 1
      %p198 = por %p196, %p197
      %p200 = scmp.ne.s32.totalorder %s183, %s199
      %p201 = scmp.eq.s32.totalorder %s28, 0
      %p202 = por %p200, %p201
      %s203 = ssub.s32 %s29, %s48
      %s204 = ssub.s32 %s30, %s44
      %s205 = sor.u32 %s203, %s204
      %p206 = scmp.eq.s32.totalorder %s205, 0
      %s208 = sadd.s32 %s207, 1
      %s209 = scalar_select %p206, %s207, %s208
      %p212 = pneg %p206
      %p213 = scmp.eq.s32.totalorder %s22, 1
      %p214 = por %p212, %p213
      %p215 = scmp.ne.s32.totalorder %s207, %s210
      %p216 = scmp.eq.s32.totalorder %s22, 0
      %p217 = por %p215, %p216
      %p218 = scmp.ne.s32.totalorder %s207, %s210
      %p219 = scmp.eq.s32.totalorder %s27, 1
      %p220 = por %p218, %p219
      %p221 = scmp.ne.s32.totalorder %s210, %s211
      %p222 = scmp.eq.s32.totalorder %s27, 0
      %p223 = por %p221, %p222
      %p224 = scmp.ne.s32.totalorder %s210, %s211
      %p225 = scmp.eq.s32.totalorder %s28, 1
      %p226 = por %p224, %p225
      %p228 = scmp.ne.s32.totalorder %s211, %s227
      %p229 = scmp.eq.s32.totalorder %s28, 0
      %p230 = por %p228, %p229
      %p231 = scmp.le.s32.totalorder 1, %s22
      %p232 = scmp.lt.s32.totalorder %s22, 3
      %p233 = pnand %p231, %p232
      %p234 = pneg %p233
      // Predicated region
      $region9: #{tpu_custom_call.1} parent=5 // pred_check
        _
      $region10: #{tpu_custom_call.1} parent=5 // pred_check_branch
        %236 = sbr.rel (%p233) target = $region12
      $region11: #{tpu_custom_call.1} parent=5 // pred_region
        %s237 = ssub.s32 %s22, 1
        // Predicated region
        $region13: #{tpu_custom_call.1} parent=11 // pred_check
          %p238 = pneg %p146
        $region14: #{tpu_custom_call.1} parent=11 // pred_check_branch
          %240 = sbr.rel (%p238) target = $region16
        $region15: #{tpu_custom_call.1} parent=11 // pred_region
          %s242 = ssub.s32 768, 768
          %243 = vsyncadd [#allocation13], %s242
          %s244 = sshll.u32 [#allocation12], 4
          %s245 = int_to_ptr.vmem [resolvable:$true] %s244
          %250 = dma.hbm_to_vmem [thread:$0]  %s3, 768, %s245, [#allocation13], 64, 64, 4
        $region16: #{tpu_custom_call.1} parent=11 // pred_fallthru
          _
        // Predicated region
        $region17: #{tpu_custom_call.1} parent=11 // pred_check
          %p251 = pneg %p167
        $region18: #{tpu_custom_call.1} parent=11 // pred_check_branch
          %253 = sbr.rel (%p251) target = $region20
        $region19: #{tpu_custom_call.1} parent=11 // pred_region
          _
        $region20: #{tpu_custom_call.1} parent=11 // pred_fallthru
          _
      $region12: #{tpu_custom_call.1} parent=5 // pred_fallthru
        _
      %p254 = scmp.lt.s32.totalorder %s22, 2
      // Predicated region
      $region21: #{tpu_custom_call.1} parent=5 // pred_check
        %p255 = pneg %p254
      $region22: #{tpu_custom_call.1} parent=5 // pred_check_branch
        %257 = sbr.rel (%p255) target = $region24
      $region23: #{tpu_custom_call.1} parent=5 // pred_region
        // Predicated region
        $region25: #{tpu_custom_call.1} parent=23 // pred_check
          %p258 = pneg %p63
        $region26: #{tpu_custom_call.1} parent=23 // pred_check_branch
          %260 = sbr.rel (%p258) target = $region28
        $region27: #{tpu_custom_call.1} parent=23 // pred_region
          %s261 = sand.u32 %s53, 1
          %s262 = scalar_lea.sflag [#allocation7], %s261
          %s263 = sand.u32 %s53, 1
          %s264 = smul.addr %s263, 4
          %s265 = scalar_lea.vmem [#allocation6], %s264
          %s267 = ssub.s32 64, 64
          %268 = vsyncadd %s262, %s267
          %s269 = sadd.s32 %s30, %s29
          %s270 = smul.addr %s269, 64
          %s271 = scalar_lea.hbm %s0, %s270
          %s273 = sshll.u32 %s265, 4
          %s274 = int_to_ptr.vmem [resolvable:$true] %s273
          %276 = dma.hbm_to_vmem [thread:$0]  %s271, 64, %s274, %s262
        $region28: #{tpu_custom_call.1} parent=23 // pred_fallthru
          _
        // Predicated region
        $region29: #{tpu_custom_call.1} parent=23 // pred_check
          %p277 = pneg %p91
        $region30: #{tpu_custom_call.1} parent=23 // pred_check_branch
          %279 = sbr.rel (%p277) target = $region32
        $region31: #{tpu_custom_call.1} parent=23 // pred_region
          %s280 = sand.u32 %s22, 1
          %s281 = scalar_lea.sflag [#allocation10], %s280
          %s282 = sand.u32 %s81, 1
          %s283 = smul.addr %s282, 4
          %s284 = scalar_lea.vmem [#allocation9], %s283
          %s286 = ssub.s32 64, 64
          %287 = vsyncadd %s281, %s286
          %s288 = sadd.s32 %s31, %s29
          %s289 = smul.addr %s288, 64
          %s290 = scalar_lea.hbm %s1, %s289
          %s292 = sshll.u32 %s284, 4
          %s293 = int_to_ptr.vmem [resolvable:$true] %s292
          %295 = dma.hbm_to_vmem [thread:$0]  %s290, 64, %s293, %s281
        $region32: #{tpu_custom_call.1} parent=23 // pred_fallthru
          _
        // Predicated region
        $region33: #{tpu_custom_call.1} parent=23 // pred_check
          %p296 = pneg %p119
        $region34: #{tpu_custom_call.1} parent=23 // pred_check_branch
          %298 = sbr.rel (%p296) target = $region36
        $region35: #{tpu_custom_call.1} parent=23 // pred_region
          %s299 = sand.u32 %s22, 1
          %s300 = scalar_lea.sflag [#allocation10], %s299
          %s301 = sand.u32 %s109, 1
          %s302 = smul.addr %s301, 4
          %s303 = scalar_lea.vmem [#allocation11], %s302
          %s305 = ssub.s32 64, 64
          %306 = vsyncadd %s300, %s305
          %s307 = sadd.s32 %s31, %s29
          %s308 = smul.addr %s307, 64
          %s309 = scalar_lea.hbm %s2, %s308
          %s311 = sshll.u32 %s303, 4
          %s312 = int_to_ptr.vmem [resolvable:$true] %s311
          %314 = dma.hbm_to_vmem [thread:$0]  %s309, 64, %s312, %s300
        $region36: #{tpu_custom_call.1} parent=23 // pred_fallthru
          _
        // Predicated region
        $region37: #{tpu_custom_call.1} parent=23 // pred_check
          %p315 = pneg %p189
        $region38: #{tpu_custom_call.1} parent=23 // pred_check_branch
          %317 = sbr.rel (%p315) target = $region40
        $region39: #{tpu_custom_call.1} parent=23 // pred_region
          %p318 = scmp.lt.s32.totalorder %s29, 1
          %s319 = scalar_select %p318, %s29, 1
          %p320 = scmp.lt.s32.totalorder %s31, 0
          %s321 = scalar_select %p320, %s31, 0
          %s322 = sadd.s32 %s321, %s319
          %s323 = scalar_lea.vmem %s5, %s322
        $region40: #{tpu_custom_call.1} parent=23 // pred_fallthru
          _
      $region24: #{tpu_custom_call.1} parent=5 // pred_fallthru
        _
      %p324 = scmp.le.s32.totalorder 1, %s22
      %p325 = scmp.lt.s32.totalorder %s22, 3
      %p326 = pnand %p324, %p325
      %p327 = pneg %p326
      // Predicated region
      $region41: #{tpu_custom_call.1} parent=5 // pred_check
        _
      $region42: #{tpu_custom_call.1} parent=5 // pred_check_branch
        %329 = sbr.rel (%p326) target = $region44
      $region43: #{tpu_custom_call.1} parent=5 // pred_region
        %s330 = ssub.s32 %s22, 1
        %s331 = sand.u32 %s56, 1
        %s332 = scalar_lea.sflag [#allocation7], %s331
        %s333 = sand.u32 %s56, 1
        %s334 = smul.addr %s333, 4
        %s335 = scalar_lea.vmem [#allocation6], %s334
        // Predicated region
        $region45: #{tpu_custom_call.1} parent=43 // pred_check
          %p336 = pneg %p69
        $region46: #{tpu_custom_call.1} parent=43 // pred_check_branch
          %338 = sbr.rel (%p336) target = $region48
        $region47: #{tpu_custom_call.1} parent=43 // pred_region
          %339 = dma.done %s332, 64
        $region48: #{tpu_custom_call.1} parent=43 // pred_fallthru
          _
        %s340 = sand.u32 %s27, 1
        %s341 = scalar_lea.sflag [#allocation10], %s340
        %s342 = sand.u32 %s84, 1
        %s343 = smul.addr %s342, 4
        %s344 = scalar_lea.vmem [#allocation9], %s343
        // Predicated region
        $region49: #{tpu_custom_call.1} parent=43 // pred_check
          %p345 = pneg %p97
        $region50: #{tpu_custom_call.1} parent=43 // pred_check_branch
          %347 = sbr.rel (%p345) target = $region52
        $region51: #{tpu_custom_call.1} parent=43 // pred_region
          %348 = dma.done %s341, 64
        $region52: #{tpu_custom_call.1} parent=43 // pred_fallthru
          _
        %s349 = sand.u32 %s27, 1
        %s350 = scalar_lea.sflag [#allocation10], %s349
        %s351 = sand.u32 %s112, 1
        %s352 = smul.addr %s351, 4
        %s353 = scalar_lea.vmem [#allocation11], %s352
        // Predicated region
        $region53: #{tpu_custom_call.1} parent=43 // pred_check
          %p354 = pneg %p125
        $region54: #{tpu_custom_call.1} parent=43 // pred_check_branch
          %356 = sbr.rel (%p354) target = $region56
        $region55: #{tpu_custom_call.1} parent=43 // pred_region
          %357 = dma.done %s350, 64
        $region56: #{tpu_custom_call.1} parent=43 // pred_fallthru
          _
        // Predicated region
        $region57: #{tpu_custom_call.1} parent=43 // pred_check
          %p358 = pneg %p146
        $region58: #{tpu_custom_call.1} parent=43 // pred_check_branch
          %360 = sbr.rel (%p358) target = $region60
        $region59: #{tpu_custom_call.1} parent=43 // pred_region
          %361 = dma.done [#allocation13], 768
        $region60: #{tpu_custom_call.1} parent=43 // pred_fallthru
          _
        %s362 = sand.u32 %s56, 1
        %s363 = scalar_lea.sflag [#allocation7], %s362
        %s364 = sand.u32 %s56, 1
        %s365 = smul.addr %s364, 4
        %s366 = scalar_lea.vmem [#allocation6], %s365
        %p367 = pneg %p69
        %p368 = pneg %p66
        %s369 = sand.u32 %s27, 1
        %s370 = scalar_lea.sflag [#allocation10], %s369
        %s371 = sand.u32 %s84, 1
        %s372 = smul.addr %s371, 4
        %s373 = scalar_lea.vmem [#allocation9], %s372
        %p374 = pneg %p97
        %p375 = pneg %p94
        %s376 = sand.u32 %s27, 1
        %s377 = scalar_lea.sflag [#allocation10], %s376
        %s378 = sand.u32 %s112, 1
        %s379 = smul.addr %s378, 4
        %s380 = scalar_lea.vmem [#allocation11], %s379
        %p381 = pneg %p125
        %p382 = pneg %p122
        %p383 = pneg %p146
        %p384 = pneg %p143
        %p385 = pneg %p167
        %p386 = pneg %p164
        %p387 = scmp.lt.s32.totalorder %s32, 1
        %s388 = scalar_select %p387, %s32, 1
        %p389 = scmp.lt.s32.totalorder %s34, 0
        %s390 = scalar_select %p389, %s34, 0
        %s391 = sadd.s32 %s390, %s388
        %s392 = scalar_lea.vmem %s5, %s391
        %p393 = pneg %p195
        %p394 = pneg %p192
        %p395 = pneg %p223
        %p396 = pneg %p220
        %s397 = sand.u32 %s210, 1
        %s398 = scalar_lea.sflag [#allocation8], %s397
        %s399 = sand.u32 %s210, 1
        %s400 = smul.addr %s399, 8
        %s401 = scalar_lea.vmem [#allocation14], %s400
        %p402 = scmp.lt.s32.totalorder %s32, 1
        %s403 = scalar_select %p402, %s32, 1
        %p404 = scmp.lt.s32.totalorder %s34, 0
        %s405 = scalar_select %p404, %s34, 0
        %s406 = sadd.s32 %s405, %s403
        %s407 = scalar_lea.vmem %s5, %s406
        %p409 = scmp.eq.s32.totalorder %s34, 0
        // Predicated region
        $region61: #{tpu_custom_call.1} parent=43 // pred_check
          %p410 = pneg %p409
        $region62: #{tpu_custom_call.1} parent=43 // pred_check_branch
          %412 = sbr.rel (%p410) target = $region64
        $region63: #{tpu_custom_call.1} parent=43 // pred_region
          %v413 = vld [vmem:[#allocation12] sm:$0xf]
          %v414 = vld [vmem:[#allocation12 + $0x4] sm:$0xf]
          %v415 = vld [vmem:[#allocation12 + $0x8] sm:$0xf]
          %v416 = vld [vmem:[#allocation12 + $0xc] sm:$0xf]
          %v417 = vld [vmem:[%s4] sm:$0x1]
          %v418 = vld [vmem:[%s335] sm:$0xf]
          %v420 = vlaneseq
          %v421 = vshrl.u32 %v420, 7
          %v422 = vsub.s32 0, %v421
          %v423 = vrot.slane %v417, %v422
          %v429 = vunpack.c.l.b16 %v413
          %v430 = vunpack.c.l.b16 %v414
          %v431 = vunpack.c.l.b16 %v415
          %v432 = vunpack.c.l.b16 %v416
          %v433 = vpack.c.b16 %v430, %v429
          %v434 = vpack.c.b16 %v432, %v431
          %vm437 = vcmask 261120
          %v439 = vsel %vm437, %v418, 0
          %441 = vmatprep.subr.bf16.mxu0 0
          %442 = vmatpush1.bf16.msra.mxu0 %v433
          %443 = vmatprep.subr.bf16.mxu0 0
          %444 = vmatpush1.bf16.msra.mxu0 %v434
          %445 = vmatprep.subr.bf16.mxu0 0
          %446 = vmatpush1.bf16.msra.mxu0 0
          %447 = vmatprep.subr.bf16.mxu0 0
          %448 = vmatpush1.bf16.msra.mxu0 0
          %449 = vmatprep.subr.bf16.mxu0 0
          %450 = vmatpush1.bf16.msra.mxu0 0
          %451 = vmatprep.subr.bf16.mxu0 0
          %452 = vmatpush1.bf16.msra.mxu0 0
          %453 = vmatprep.subr.bf16.mxu0 0
          %454 = vmatpush1.bf16.msra.mxu0 0
          %455 = vmatprep.subr.bf16.mxu0 0
          %456 = vmatpush1.bf16.msra.mxu0 0
          %457 = vmatprep.subr.bf16.mxu0 0
          %458 = vmatpush1.bf16.msra.mxu0 0
          %459 = vmatprep.subr.bf16.mxu0 0
          %460 = vmatpush1.bf16.msra.mxu0 0
          %461 = vmatprep.subr.bf16.mxu0 0
          %462 = vmatpush1.bf16.msra.mxu0 0
          %463 = vmatprep.subr.bf16.mxu0 0
          %464 = vmatpush1.bf16.msra.mxu0 0
          %465 = vmatprep.subr.bf16.mxu0 0
          %466 = vmatpush1.bf16.msra.mxu0 0
          %467 = vmatprep.subr.bf16.mxu0 0
          %468 = vmatpush1.bf16.msra.mxu0 0
          %469 = vmatprep.subr.bf16.mxu0 0
          %470 = vmatpush1.bf16.msra.mxu0 0
          %471 = vmatprep.subr.bf16.mxu0 0
          %472 = vmatpush1.bf16.msra.mxu0 0
          %473 = vmatprep.mubr.bf16.mxu0 0
          %474 = vmatmul.mubr.bf16.gmra.mrb[0].mxu0 %v439
          %v475 = vpop.f32.mrb[0].mxu0
          %v476 = vadd.f32 %v423, %v475
          %v477 = vpop.f32.mrb[0].mxu0
          %v478 = vpop.f32.mrb[0].mxu0
          %v479 = vpop.f32.mrb[0].mxu0
          %480 = vdwg.mxu0
          %v481 = vmul.f32 %v476, 0.25
          %v482 = vpack.c.bf16 %v481, %v481
          %483 = vst [vmem:[#allocation2] sm:$0xf] %v482
          %vm484 = vcmask 7168
          %485 = vst.msk [vmem:[#allocation3] sm:$0xff] %vm484, -inf
          %486 = vst.msk [vmem:[#allocation4] sm:$0xff] %vm484, 0.0
          %487 = vst [vmem:[#allocation5] sm:$0xff] 0.0
        $region64: #{tpu_custom_call.1} parent=43 // pred_fallthru
          _
        %v488 = vld [vmem:[%s344] sm:$0xf]
        %s489 = scalar_lea.vmem [#allocation12], 16
        %v490 = vld [vmem:[%s489] sm:$0xf]
        %v491 = vld [vmem:[%s489 + $0x4] sm:$0xf]
        %v492 = vld [vmem:[%s489 + $0x8] sm:$0xf]
        %v493 = vld [vmem:[%s489 + $0xc] sm:$0xf]
        %s494 = scalar_lea.vmem %s4, 1
        %v495 = vld [vmem:[%s494] sm:$0x1]
        %v497 = vlaneseq
        %v498 = vshrl.u32 %v497, 7
        %v499 = vsub.s32 0, %v498
        %v500 = vrot.slane %v495, %v499
        %v506 = vunpack.c.l.b16 %v490
        %v507 = vunpack.c.l.b16 %v491
        %v508 = vunpack.c.l.b16 %v492
        %v509 = vunpack.c.l.b16 %v493
        %v510 = vpack.c.b16 %v507, %v506
        %v511 = vpack.c.b16 %v509, %v508
        %vm514 = vcmask 261120
        %v516 = vsel %vm514, %v488, 0
        %518 = vmatprep.subr.bf16.mxu0 0
        %519 = vmatpush1.bf16.msra.mxu0 %v510
        %520 = vmatprep.subr.bf16.mxu0 0
        %521 = vmatpush1.bf16.msra.mxu0 %v511
        %522 = vmatprep.subr.bf16.mxu0 0
        %523 = vmatpush1.bf16.msra.mxu0 0
        %524 = vmatprep.subr.bf16.mxu0 0
        %525 = vmatpush1.bf16.msra.mxu0 0
        %526 = vmatprep.subr.bf16.mxu0 0
        %527 = vmatpush1.bf16.msra.mxu0 0
        %528 = vmatprep.subr.bf16.mxu0 0
        %529 = vmatpush1.bf16.msra.mxu0 0
        %530 = vmatprep.subr.bf16.mxu0 0
        %531 = vmatpush1.bf16.msra.mxu0 0
        %532 = vmatprep.subr.bf16.mxu0 0
        %533 = vmatpush1.bf16.msra.mxu0 0
        %534 = vmatprep.subr.bf16.mxu0 0
        %535 = vmatpush1.bf16.msra.mxu0 0
        %536 = vmatprep.subr.bf16.mxu0 0
        %537 = vmatpush1.bf16.msra.mxu0 0
        %538 = vmatprep.subr.bf16.mxu0 0
        %539 = vmatpush1.bf16.msra.mxu0 0
        %540 = vmatprep.subr.bf16.mxu0 0
        %541 = vmatpush1.bf16.msra.mxu0 0
        %542 = vmatprep.subr.bf16.mxu0 0
        %543 = vmatpush1.bf16.msra.mxu0 0
        %544 = vmatprep.subr.bf16.mxu0 0
        %545 = vmatpush1.bf16.msra.mxu0 0
        %546 = vmatprep.subr.bf16.mxu0 0
        %547 = vmatpush1.bf16.msra.mxu0 0
        %548 = vmatprep.subr.bf16.mxu0 0
        %549 = vmatpush1.bf16.msra.mxu0 0
        %550 = vmatprep.mubr.bf16.mxu0 0
        %551 = vmatmul.mubr.bf16.gmra.mrb[0].mxu0 %v516
        %v552 = vpop.f32.mrb[0].mxu0
        %v553 = vadd.f32 %v500, %v552
        %v554 = vpop.f32.mrb[0].mxu0
        %v555 = vpop.f32.mrb[0].mxu0
        %v556 = vpop.f32.mrb[0].mxu0
        %557 = vdwg.mxu0
        %v558 = vld [vmem:[%s353] sm:$0xf]
        %s559 = scalar_lea.vmem [#allocation12], 32
        %v560 = vld [vmem:[%s559] sm:$0xf]
        %v561 = vld [vmem:[%s559 + $0x4] sm:$0xf]
        %v562 = vld [vmem:[%s559 + $0x8] sm:$0xf]
        %v563 = vld [vmem:[%s559 + $0xc] sm:$0xf]
        %s564 = scalar_lea.vmem %s4, 2
        %v565 = vld [vmem:[%s564] sm:$0x1]
        %v567 = vlaneseq
        %v568 = vshrl.u32 %v567, 7
        %v569 = vsub.s32 0, %v568
        %v570 = vrot.slane %v565, %v569
        %v576 = vunpack.c.l.b16 %v560
        %v577 = vunpack.c.l.b16 %v561
        %v578 = vunpack.c.l.b16 %v562
        %v579 = vunpack.c.l.b16 %v563
        %v580 = vpack.c.b16 %v577, %v576
        %v581 = vpack.c.b16 %v579, %v578
        %v585 = vsel %vm514, %v558, 0
        %587 = vmatprep.subr.bf16.mxu0 0
        %588 = vmatpush1.bf16.msra.mxu0 %v580
        %589 = vmatprep.subr.bf16.mxu0 0
        %590 = vmatpush1.bf16.msra.mxu0 %v581
        %591 = vmatprep.subr.bf16.mxu0 0
        %592 = vmatpush1.bf16.msra.mxu0 0
        %593 = vmatprep.subr.bf16.mxu0 0
        %594 = vmatpush1.bf16.msra.mxu0 0
        %595 = vmatprep.subr.bf16.mxu0 0
        %596 = vmatpush1.bf16.msra.mxu0 0
        %597 = vmatprep.subr.bf16.mxu0 0
        %598 = vmatpush1.bf16.msra.mxu0 0
        %599 = vmatprep.subr.bf16.mxu0 0
        %600 = vmatpush1.bf16.msra.mxu0 0
        %601 = vmatprep.subr.bf16.mxu0 0
        %602 = vmatpush1.bf16.msra.mxu0 0
        %603 = vmatprep.subr.bf16.mxu0 0
        %604 = vmatpush1.bf16.msra.mxu0 0
        %605 = vmatprep.subr.bf16.mxu0 0
        %606 = vmatpush1.bf16.msra.mxu0 0
        %607 = vmatprep.subr.bf16.mxu0 0
        %608 = vmatpush1.bf16.msra.mxu0 0
        %609 = vmatprep.subr.bf16.mxu0 0
        %610 = vmatpush1.bf16.msra.mxu0 0
        %611 = vmatprep.subr.bf16.mxu0 0
        %612 = vmatpush1.bf16.msra.mxu0 0
        %613 = vmatprep.subr.bf16.mxu0 0
        %614 = vmatpush1.bf16.msra.mxu0 0
        %615 = vmatprep.subr.bf16.mxu0 0
        %616 = vmatpush1.bf16.msra.mxu0 0
        %617 = vmatprep.subr.bf16.mxu0 0
        %618 = vmatpush1.bf16.msra.mxu0 0
        %619 = vmatprep.mubr.bf16.mxu0 0
        %620 = vmatmul.mubr.bf16.gmra.mrb[0].mxu0 %v585
        %v621 = vpop.f32.mrb[0].mxu0
        %v622 = vadd.f32 %v570, %v621
        %v623 = vpop.f32.mrb[0].mxu0
        %v624 = vpop.f32.mrb[0].mxu0
        %v625 = vpop.f32.mrb[0].mxu0
        %626 = vdwg.mxu0
        %v627 = vpack.c.bf16 %v553, %v553
        %v628 = vpack.c.bf16 %v622, %v622
        %v629 = vld [vmem:[#allocation2] sm:$0xf]
        %v630 = vld [vmem:[%s407] sm:$0x1]
        %v632 = vlaneseq
        %v633 = vshrl.u32 %v632, 7
        %v634 = vsub.s32 0, %v633
        %v635 = vrot.slane %v630, %v634
        %637 = vmatprep.subr.bf16.mxu0 0
        %638 = vmatpush1.bf16.xpose.msra.mxu0 %v627
        %639 = vmatprep.subr.bf16.mxu0 0
        %640 = vmatpush1.bf16.xpose.msra.mxu0 0
        %641 = vmatprep.subr.bf16.mxu0 0
        %642 = vmatpush1.bf16.xpose.msra.mxu0 0
        %643 = vmatprep.subr.bf16.mxu0 0
        %644 = vmatpush1.bf16.xpose.msra.mxu0 0
        %645 = vmatprep.subr.bf16.mxu0 0
        %646 = vmatpush1.bf16.xpose.msra.mxu0 0
        %647 = vmatprep.subr.bf16.mxu0 0
        %648 = vmatpush1.bf16.xpose.msra.mxu0 0
        %649 = vmatprep.subr.bf16.mxu0 0
        %650 = vmatpush1.bf16.xpose.msra.mxu0 0
        %651 = vmatprep.subr.bf16.mxu0 0
        %652 = vmatpush1.bf16.xpose.msra.mxu0 0
        %653 = vmatprep.subr.bf16.mxu0 0
        %654 = vmatpush1.bf16.xpose.msra.mxu0 0
        %655 = vmatprep.subr.bf16.mxu0 0
        %656 = vmatpush1.bf16.xpose.msra.mxu0 0
        %657 = vmatprep.subr.bf16.mxu0 0
        %658 = vmatpush1.bf16.xpose.msra.mxu0 0
        %659 = vmatprep.subr.bf16.mxu0 0
        %660 = vmatpush1.bf16.xpose.msra.mxu0 0
        %661 = vmatprep.subr.bf16.mxu0 0
        %662 = vmatpush1.bf16.xpose.msra.mxu0 0
        %663 = vmatprep.subr.bf16.mxu0 0
        %664 = vmatpush1.bf16.xpose.msra.mxu0 0
        %665 = vmatprep.subr.bf16.mxu0 0
        %666 = vmatpush1.bf16.xpose.msra.mxu0 0
        %667 = vmatprep.subr.bf16.mxu0 0
        %668 = vmatpush1.bf16.xpose.msra.mxu0 0
        %669 = vmatprep.mubr.bf16.mxu0 0
        %670 = vmatmul.mubr.bf16.gmra.mrb[0].mxu0 %v629
        %v671 = vpop.f32.mrb[0].mxu0
        %v672 = vadd.f32 %v635, %v671
        %v673 = vpop.f32.mrb[0].mxu0
        %v674 = vpop.f32.mrb[0].mxu0
        %v675 = vpop.f32.mrb[0].mxu0
        %676 = vdwg.mxu0
        %v677 = vld [vmem:[#allocation3] sm:$0xff]
        %vm678 = vcmask 64512
        %v679 = vsel %vm678, %v672, -inf
        %680 = vmax.xlane.f32.xlu0 %v679
        %v681 = vpop.xlane.xlu0 %680
        %v682 = vmax.f32 %v677, %v681
        %v683 = vsub.f32 %v677, %v682
        %v684 = vmul.f32 %v683, 1.442695
        %v685 = vpow.pop %v684
        %687 = vset.pattern.permute.xlu0 0
        %688 = vperm.xlu0 %687, %v682
        %v689 = vpop.permute.xlu0 %688
        %v691 = vsub.f32 %v672, %v689
        %v692 = vpack.c.bf16 %v691, %v691
        %v694 = vmul.bf16 %v692, 1069105081
        %v695 = vpow.bf16.pop %v694
        %v696 = vld [vmem:[#allocation4] sm:$0xff]
        %v697 = vmul.f32 %v685, %v696
        %v698 = vunpack.c.l.bf16 %v695
        %v699 = vsel %vm678, %v698, 0.0
        %700 = vadd.xlane.f32.xlu0 %v699
        %v701 = vpop.xlane.xlu0 %700
        %v702 = vadd.f32 %v697, %v701
        %vm703 = vcmask 7168
        %704 = vst.msk [vmem:[#allocation4] sm:$0xff] %vm703, %v702
        %v705 = vld [vmem:[#allocation5] sm:$0xff]
        %707 = vset.pattern.permute.xlu0 0
        %708 = vperm.xlu0 %707, %v685
        %v709 = vpop.permute.xlu0 %708
        %v711 = vmul.f32 %v709, %v705
        %v713 = vsel %vm678, %v695, 0
        %vm715 = vcmask 1043456
        %v717 = vsel %vm715, %v628, 0
        %719 = vmatprep.subr.bf16.mxu0 0
        %720 = vmatpush1.bf16.msra.mxu0 %v717
        %721 = vmatprep.subr.bf16.mxu0 0
        %722 = vmatpush1.bf16.msra.mxu0 0
        %723 = vmatprep.subr.bf16.mxu0 0
        %724 = vmatpush1.bf16.msra.mxu0 0
        %725 = vmatprep.subr.bf16.mxu0 0
        %726 = vmatpush1.bf16.msra.mxu0 0
        %727 = vmatprep.subr.bf16.mxu0 0
        %728 = vmatpush1.bf16.msra.mxu0 0
        %729 = vmatprep.subr.bf16.mxu0 0
        %730 = vmatpush1.bf16.msra.mxu0 0
        %731 = vmatprep.subr.bf16.mxu0 0
        %732 = vmatpush1.bf16.msra.mxu0 0
        %733 = vmatprep.subr.bf16.mxu0 0
        %734 = vmatpush1.bf16.msra.mxu0 0
        %735 = vmatprep.subr.bf16.mxu0 0
        %736 = vmatpush1.bf16.msra.mxu0 0
        %737 = vmatprep.subr.bf16.mxu0 0
        %738 = vmatpush1.bf16.msra.mxu0 0
        %739 = vmatprep.subr.bf16.mxu0 0
        %740 = vmatpush1.bf16.msra.mxu0 0
        %741 = vmatprep.subr.bf16.mxu0 0
        %742 = vmatpush1.bf16.msra.mxu0 0
        %743 = vmatprep.subr.bf16.mxu0 0
        %744 = vmatpush1.bf16.msra.mxu0 0
        %745 = vmatprep.subr.bf16.mxu0 0
        %746 = vmatpush1.bf16.msra.mxu0 0
        %747 = vmatprep.subr.bf16.mxu0 0
        %748 = vmatpush1.bf16.msra.mxu0 0
        %749 = vmatprep.subr.bf16.mxu0 0
        %750 = vmatpush1.bf16.msra.mxu0 0
        %751 = vmatprep.mubr.bf16.mxu0 0
        %752 = vmatmul.mubr.bf16.gmra.mrb[0].mxu0 %v713
        %v753 = vpop.f32.mrb[0].mxu0
        %v754 = vadd.f32 0.0, %v753
        %v755 = vpop.f32.mrb[0].mxu0
        %v756 = vpop.f32.mrb[0].mxu0
        %v757 = vpop.f32.mrb[0].mxu0
        %758 = vdwg.mxu0
        %v759 = vadd.f32 %v711, %v754
        %760 = vst [vmem:[#allocation5] sm:$0xff] %v759
        %761 = vst.msk [vmem:[#allocation3] sm:$0xff] %vm703, %v682
        // Predicated region
        $region65: #{tpu_custom_call.1} parent=43 // pred_check
          %p762 = pneg %p409
        $region66: #{tpu_custom_call.1} parent=43 // pred_check_branch
          %764 = sbr.rel (%p762) target = $region68
        $region67: #{tpu_custom_call.1} parent=43 // pred_region
          %v765 = vld [vmem:[#allocation4] sm:$0xff]
          %v766 = vrcp.pop %v765
          %v767 = vmul.f32 %v765, %v766
          %v768 = vsub.f32 2.0, %v767
          %v769 = vmul.f32 %v766, %v768
          %v770 = vld [vmem:[#allocation5] sm:$0xff]
          %772 = vset.pattern.permute.xlu0 0
          %773 = vperm.xlu0 %772, %v769
          %v774 = vpop.permute.xlu0 %773
          %v776 = vmul.f32 %v770, %v774
          %777 = vst [vmem:[%s401] sm:$0xff] %v776
        $region68: #{tpu_custom_call.1} parent=43 // pred_fallthru
          _
        %s778 = sand.u32 %s210, 1
        %s779 = scalar_lea.sflag [#allocation8], %s778
        %s780 = sand.u32 %s210, 1
        %s781 = smul.addr %s780, 8
        %s782 = scalar_lea.vmem [#allocation14], %s781
        // Predicated region
        $region69: #{tpu_custom_call.1} parent=43 // pred_check
          %p783 = pneg %p220
        $region70: #{tpu_custom_call.1} parent=43 // pred_check_branch
          %785 = sbr.rel (%p783) target = $region72
        $region71: #{tpu_custom_call.1} parent=43 // pred_region
          %s787 = ssub.s32 128, 128
          %788 = vsyncadd %s779, %s787
          %s789 = sadd.s32 %s33, %s32
          %s790 = smul.addr %s789, 128
          %s791 = scalar_lea.hbm %s6, %s790
          %s793 = sshll.u32 %s782, 4
          %s794 = int_to_ptr.vmem [resolvable:$true] %s793
          %796 = dma.vmem_to_hbm [thread:$0]  %s794, 128, %s791, %s779
        $region72: #{tpu_custom_call.1} parent=43 // pred_fallthru
          _
      $region44: #{tpu_custom_call.1} parent=5 // pred_fallthru
        _
      %p797 = scmp.le.s32.totalorder 2, %s22
      // Predicated region
      $region73: #{tpu_custom_call.1} parent=5 // pred_check
        %p798 = pneg %p797
      $region74: #{tpu_custom_call.1} parent=5 // pred_check_branch
        %800 = sbr.rel (%p798) target = $region76
      $region75: #{tpu_custom_call.1} parent=5 // pred_region
        %s801 = ssub.s32 %s22, 2
        // Predicated region
        $region77: #{tpu_custom_call.1} parent=75 // pred_check
          %p802 = pneg %p226
        $region78: #{tpu_custom_call.1} parent=75 // pred_check_branch
          %804 = sbr.rel (%p802) target = $region80
        $region79: #{tpu_custom_call.1} parent=75 // pred_region
          %s805 = sand.u32 %s211, 1
          %s806 = scalar_lea.sflag [#allocation8], %s805
          %s807 = sand.u32 %s211, 1
          %s808 = smul.addr %s807, 8
          %s809 = scalar_lea.vmem [#allocation14], %s808
          %810 = dma.done %s806, 128
        $region80: #{tpu_custom_call.1} parent=75 // pred_fallthru
          _
      $region76: #{tpu_custom_call.1} parent=5 // pred_fallthru
        _
    $region6: #{tpu_custom_call.1} parent=1 // loop_footer
      %s26 = sadd.s32 1, %s22
    $region7: #{tpu_custom_call.1} parent=1 // loop_footer_branch
      %21 = sbr.rel target = $region3
    $region8: #{tpu_custom_call.1} parent=1 // loop_exit
      _
    %811 = vsyncpa [#allocation7], 1
    %s812 = scalar_lea.sflag [#allocation7], 1
    %813 = vsyncpa %s812, 1
    %814 = vsyncpa [#allocation10], 1
    %s815 = scalar_lea.sflag [#allocation10], 1
    %816 = vsyncpa %s815, 1
    %817 = vsyncpa [#allocation13], 1
    %818 = vsyncpa [#allocation8], 1
    %s819 = scalar_lea.sflag [#allocation8], 1
    %820 = vsyncpa %s819, 1

</llo_original>
